<compile_context>
chip_gen: v7x
topology: tpu7x:2x2x1
jax: 0.10.0
libtpu: 0.0.40
codegen_flags: <defaults>
</compile_context>

<pallas_src>
import functools

import jax
import jax.numpy as jnp
from jax.experimental import pallas as pl
from jax.experimental.pallas import tpu as pltpu

_LANE = 1024           # lane-dense last dim (large multiple of 128)
_MAX_BLOCK_ROWS = 512  # (512, 1024) f32 = 2 MiB per block


def _fake_quant_kernel(x_ref, o_ref, *, x_min, scale, inv_scale, levels,
                       floor_tensor):
    # Straight VPU streaming kernel: load tile, fake-quant, store tile.
    x = x_ref[...].astype(jnp.float32)
    q = (x - x_min) * inv_scale
    if floor_tensor:
        q = jnp.floor(q)
    else:
        q = jnp.round(q)
    q = jnp.clip(q, 0.0, levels)
    o_ref[...] = (q * scale + x_min).astype(o_ref.dtype)


def _round_up(a, b):
    return (a + b - 1) // b * b


def fake_quantize(x, x_min, x_max, bits, floor_tensor=False):
    """Uniform affine fake-quantization of an arbitrary-shaped array."""
    levels = float(2 ** int(bits) - 1)
    scale = (float(x_max) - float(x_min)) / levels
    scale = max(scale, 1e-8)  # guard degenerate range (x_min == x_max)
    inv_scale = 1.0 / scale

    orig_shape = x.shape
    orig_dtype = x.dtype
    total = int(x.size)

    # Flatten to a lane-dense 2D slab (rows, _LANE); pad only if needed.
    flat = x.reshape(-1)
    rows = -(-total // _LANE)  # cdiv
    if rows <= _MAX_BLOCK_ROWS:
        block_rows = rows          # single row-block == full dim (no 8x rule)
    else:
        block_rows = _MAX_BLOCK_ROWS
        rows = _round_up(rows, block_rows)
    padded = rows * _LANE
    if padded != total:
        flat = jnp.pad(flat, (0, padded - total))
    x2d = flat.reshape(rows, _LANE)

    kernel = functools.partial(
        _fake_quant_kernel,
        x_min=float(x_min),
        scale=scale,
        inv_scale=inv_scale,
        levels=levels,
        floor_tensor=bool(floor_tensor),
    )

    y2d = pl.pallas_call(
        kernel,
        out_shape=jax.ShapeDtypeStruct((rows, _LANE), orig_dtype),
        grid=(rows // block_rows,),
        in_specs=[pl.BlockSpec((block_rows, _LANE), lambda i: (i, 0))],
        out_specs=pl.BlockSpec((block_rows, _LANE), lambda i: (i, 0)),
        compiler_params=pltpu.CompilerParams(
            dimension_semantics=("parallel",),
            vmem_limit_bytes=32 << 20,
        ),
    )(x2d)

    y_flat = y2d.reshape(-1)
    if padded != total:
        y_flat = y_flat[:total]
    return y_flat.reshape(orig_shape)


class Quantizer:
    """JAX/Pallas mirror of the PyTorch Quantizer module."""

    def __init__(self, bit):
        self.bit = bit
        self.x_min_fp32 = None
        self.x_max_fp32 = None

    def init_from(self, x, bit_list, *args, **kwargs):
        # Mirror the (no-op) base-class hook; record a data-driven range.
        self.set_quant_range(float(jnp.min(x)), float(jnp.max(x)))

    def set_quant_range(self, x_min, x_max):
        self.x_min_fp32 = float(x_min)
        self.x_max_fp32 = float(x_max)

    def forward(self, x, bits, is_activation=False, floor_tensor=False):
        # TODO(synk): base-class forward raises NotImplementedError; this is
        # the canonical uniform affine fake-quant instantiation.
        assert self.x_min_fp32 is not None and self.x_max_fp32 is not None
        return fake_quantize(
            x, self.x_min_fp32, self.x_max_fp32, bits, floor_tensor)

    __call__ = forward


if __name__ == "__main__":
    key = jax.random.PRNGKey(0)
    x = jax.random.normal(key, (2, 4, 16, 16), dtype=jnp.float32)

    q = Quantizer(bit=4)
    q.set_quant_range(float(jnp.min(x)), float(jnp.max(x)))

    y = q(x, bits=4, is_activation=True, floor_tensor=False)
    y = jax.block_until_ready(y)

    # Pure-JAX reference for correctness (round path).
    levels = float(2 ** 4 - 1)
    scale = max((q.x_max_fp32 - q.x_min_fp32) / levels, 1e-8)
    ref_q = jnp.clip(jnp.round((x - q.x_min_fp32) / scale), 0.0, levels)
    ref = ref_q * scale + q.x_min_fp32

    assert y.shape == x.shape
    assert y.dtype == x.dtype
    assert bool(jnp.all(jnp.isfinite(y)))
    assert float(jnp.max(jnp.abs(y - ref))) < 1e-5
    assert float(jnp.min(y)) >= q.x_min_fp32 - 1e-5
    assert float(jnp.max(y)) <= q.x_max_fp32 + 1e-5

    # Floor path check.
    y_floor = jax.block_until_ready(q(x, bits=4, floor_tensor=True))
    ref_qf = jnp.clip(jnp.floor((x - q.x_min_fp32) / scale), 0.0, levels)
    ref_f = ref_qf * scale + q.x_min_fp32
    assert float(jnp.max(jnp.abs(y_floor - ref_f))) < 1e-5

    print("KERNEL_OK")
</pallas_src>

<mosaic_0001>
module attributes {stable_mosaic.version = 11 : i64} {
  func.func @_fake_quant_kernel(%arg0: i32, %arg1: memref<2x1024xf32, #tpu.memory_space<vmem>>, %arg2: memref<2x1024xf32, #tpu.memory_space<vmem>>) attributes {dimension_semantics = [#tpu.dimension_semantics<parallel>], iteration_bounds = array<i64: 1>, scalar_prefetch = 0 : i64, scratch_operands = 0 : i64, tpu.core_type = #tpu.core_type<tc>, window_params = [{transform_indices = @transform_0, window_bounds = array<i64: 2, 1024>}, {transform_indices = @transform_1, window_bounds = array<i64: 2, 1024>}]} {
    %c0 = arith.constant 0 : index
    %c0_0 = arith.constant 0 : index
    %0 = vector.load %arg1[%c0, %c0_0] : memref<2x1024xf32, #tpu.memory_space<vmem>>, vector<2x1024xf32>
    %cst = arith.constant -3.91686225 : f32
    %1 = vector.broadcast %cst : f32 to vector<2x1024xf32>
    %2 = arith.subf %0, %1 : vector<2x1024xf32>
    %cst_1 = arith.constant 1.99256301 : f32
    %3 = vector.broadcast %cst_1 : f32 to vector<2x1024xf32>
    %4 = arith.mulf %2, %3 : vector<2x1024xf32>
    %5 = math.roundeven %4 : vector<2x1024xf32>
    %cst_2 = arith.constant 0.000000e+00 : f32
    %cst_3 = arith.constant 1.500000e+01 : f32
    %6 = vector.broadcast %cst_2 : f32 to vector<2x1024xf32>
    %7 = arith.maximumf %6, %5 : vector<2x1024xf32>
    %8 = vector.broadcast %cst_3 : f32 to vector<2x1024xf32>
    %9 = arith.minimumf %8, %7 : vector<2x1024xf32>
    %cst_4 = arith.constant 0.501866221 : f32
    %10 = vector.broadcast %cst_4 : f32 to vector<2x1024xf32>
    %11 = arith.mulf %9, %10 : vector<2x1024xf32>
    %cst_5 = arith.constant -3.91686225 : f32
    %12 = vector.broadcast %cst_5 : f32 to vector<2x1024xf32>
    %13 = arith.addf %11, %12 : vector<2x1024xf32>
    %c0_6 = arith.constant 0 : index
    %c0_7 = arith.constant 0 : index
    %14 = vector.load %arg2[%c0_6, %c0_7] : memref<2x1024xf32, #tpu.memory_space<vmem>>, vector<2x1024xf32>
    tpu.vector_store %arg2[%c0_6, %c0_7], %13 {strides = array<i32>} : memref<2x1024xf32, #tpu.memory_space<vmem>>, vector<2x1024xf32>,
    return
  }
  func.func @transform_0(%arg0: i32) -> (i32, i32) {
    %c0_i32 = arith.constant 0 : i32
    %c0_i32_0 = arith.constant 0 : i32
    return %arg0, %c0_i32 : i32, i32
  }
  func.func @transform_1(%arg0: i32) -> (i32, i32) {
    %c0_i32 = arith.constant 0 : i32
    %c0_i32_0 = arith.constant 0 : i32
    return %arg0, %c0_i32 : i32, i32
  }
}

</mosaic_0001>

<llo_original>
// kernel: tpu_custom_call.1
$region0: #{tpu_custom_call.1}
  #allocation0 [shape = 'u32[]', space=smem, size = 0x4, offset = 0x4, fixed_abs, tag = 'smem constant byte address 0x4 - core index']
  #allocation1 [shape = 'u32[144,128]{1,0:T(1,128)}', space=vmem, size = 0x12000, scoped, tag = 'internal scratch']
  %s0 = inlined_call_operand.hbm [shape: f32[2,1024], index: 0, kind: input, shape index: {}]
  %s1 = inlined_call_operand.hbm [shape: f32[2,1024], index: 1, kind: output, shape index: {}]
  %s2 = sld [smem:[#allocation0]]
  $region18: #{tpu_custom_call.1} parent=0
    _
  %s4 = ssub.s32 1, %s2
  %s5 = scalar_select 0, %s4, %s2
  $region1: #{tpu_custom_call.1} parent=0
    #allocation2 [shape = 'u8[8192]{0}', space=vmem, size = 0x2000, scoped, tag = 'input window, operand 0, single buffered']
    #allocation3 [shape = 's32[1]{0}', space=sflag, size = 0x4, scoped, tag = 'scoped memory for tpu_custom_call.1']
    #allocation4 [shape = 's32[1]{0}', space=sflag, size = 0x4, scoped, tag = 'scoped memory for tpu_custom_call.1']
    #allocation5 [shape = 'u8[8192]{0}', space=vmem, size = 0x2000, scoped, tag = 'output window, operand 0, single buffered']
    %6 = vsyncpa [#allocation3], 0
    %7 = vsyncpa [#allocation4], 0
    // Predicated region
    $region2: #{tpu_custom_call.1} parent=1 // pred_check
      _
    $region3: #{tpu_custom_call.1} parent=1 // pred_check_branch
      %9 = sbr.rel (0) target = $region5
    $region4: #{tpu_custom_call.1} parent=1 // pred_region
      %s11 = ssub.s32 256, 256
      %12 = vsyncadd [#allocation3], %s11
      %s14 = sshll.u32 [#allocation2], 4
      %s15 = int_to_ptr.vmem [resolvable:$true] %s14
      %17 = dma.hbm_to_vmem [thread:$0]  %s0, 256, %s15, [#allocation3]
    $region5: #{tpu_custom_call.1} parent=1 // pred_fallthru
      _
    // Predicated region
    $region6: #{tpu_custom_call.1} parent=1 // pred_check
      _
    $region7: #{tpu_custom_call.1} parent=1 // pred_check_branch
      %19 = sbr.rel (0) target = $region9
    $region8: #{tpu_custom_call.1} parent=1 // pred_region
      %20 = dma.done [#allocation3], 256
    $region9: #{tpu_custom_call.1} parent=1 // pred_fallthru
      _
    %v21 = vld [vmem:[#allocation2] sm:$0xff]
    %v22 = vld [vmem:[#allocation2 + $0x8] sm:$0xff]
    %v23 = vsub.f32 %v21, -3.9168622
    %v24 = vsub.f32 %v22, -3.9168622
    %v25 = vmul.f32 %v23, 1.992563
    %v26 = vmul.f32 %v24, 1.992563
    %v27 = vround.ne.pseudo %v25
    %v28 = vround.ne.pseudo %v26
    %v29 = vmax.f32 %v27, 0.0
    %v30 = vmax.f32 %v28, 0.0
    %v31 = vmin.f32 %v29, 15.0
    %v32 = vmin.f32 %v30, 15.0
    %v33 = vmul.f32 %v31, 0.5018662
    %v34 = vmul.f32 %v32, 0.5018662
    %v35 = vadd.f32 %v33, -3.9168622
    %v36 = vadd.f32 %v34, -3.9168622
    %37 = vst [vmem:[#allocation5] sm:$0xff] %v35
    %38 = vst [vmem:[#allocation5 + $0x8] sm:$0xff] %v36
    // Predicated region
    $region10: #{tpu_custom_call.1} parent=1 // pred_check
      _
    $region11: #{tpu_custom_call.1} parent=1 // pred_check_branch
      %40 = sbr.rel (0) target = $region13
    $region12: #{tpu_custom_call.1} parent=1 // pred_region
      %s42 = ssub.s32 256, 256
      %43 = vsyncadd [#allocation4], %s42
      %s45 = sshll.u32 [#allocation5], 4
      %s46 = int_to_ptr.vmem [resolvable:$true] %s45
      %48 = dma.vmem_to_hbm [thread:$0]  %s46, 256, %s1, [#allocation4]
    $region13: #{tpu_custom_call.1} parent=1 // pred_fallthru
      _
    // Predicated region
    $region14: #{tpu_custom_call.1} parent=1 // pred_check
      _
    $region15: #{tpu_custom_call.1} parent=1 // pred_check_branch
      %50 = sbr.rel (0) target = $region17
    $region16: #{tpu_custom_call.1} parent=1 // pred_region
      %51 = dma.done [#allocation4], 256
    $region17: #{tpu_custom_call.1} parent=1 // pred_fallthru
      _
    %52 = vsyncpa [#allocation3], 1
    %53 = vsyncpa [#allocation4], 1

</llo_original>
